<compile_context>
chip_gen: v7x
topology: tpu7x:2x2x1
jax: 0.10.0
libtpu: 0.0.40
codegen_flags: <defaults>
</compile_context>

<pallas_src>
import jax
import jax.numpy as jnp
from jax.experimental import pallas as pl
from jax.experimental.pallas import tpu as pltpu


def _round_up(n, m):
    return (n + m - 1) // m * m


def _vmem_budget_bytes():
    """Generation-aware VMEM budget for tile sizing + Mosaic scoped limit."""
    try:
        info = pltpu.get_tpu_info()
        cap = int(getattr(info, "vmem_capacity_bytes", 0)) or (64 << 20)
    except Exception:
        cap = 64 << 20  # assume the smallest (v7x) part if the query fails
    return int(cap * 0.65), int(cap * 0.78)


def _single_buffered_spec(shape, index_map):
    """Constant-index-map operand (projection weight / bias): fetched once and
    single-buffered so the pipeline does not allocate a dead second copy of W.
    Falls back to the default double-buffered spec on Pallas versions without
    pipeline_mode support."""
    try:
        return pl.BlockSpec(shape, index_map, pipeline_mode=pl.Buffered(1))
    except Exception:
        return pl.BlockSpec(shape, index_map)


def _choose_block_t(B, T, D, P, x_bytes, w_bytes, b_bytes, budget):
    """Largest multiple-of-8 token tile whose VMEM footprint (pipeline buffers
    plus the in-kernel f32 temporaries) fits the budget."""
    # Resident across the grid: single-buffered W, bias, double-buffered (2, D) ss.
    resident = D * P * w_bytes + P * b_bytes + 2 * 2 * D * 4
    # Per token row:
    #   2x x tile (double-buffered input)        : 2 * D * x_bytes
    #   2x out tile (double-buffered output)     : 2 * P * x_bytes
    #   ~4 f32 (tT, D) LN temporaries            : 4 * D * 4
    #   y cast to the MXU dtype                  : D * w_bytes
    #   f32 matmul accumulator row               : P * 4
    per_token = 2 * D * x_bytes + 2 * P * x_bytes + 4 * D * 4 + D * w_bytes + P * 4
    cap = max((budget - resident) // per_token, 8)
    if T <= 8:
        tT = T  # single block equal to the full token dim (legal block shape)
    else:
        tT = int(min(cap, 1024, T))
        tT = max(8, (tT // 8) * 8)
    # v7x has 2 TensorCores sharded over the parallel grid axes: guarantee at
    # least two tiles of work when B == 1 (harmless on 1-TC v5e/v6e).
    if B == 1 and T > 8 and pl.cdiv(T, tT) < 2:
        tT = max(8, _round_up(pl.cdiv(T, 2), 8))
    return tT


def _final_layer_kernel(ss_ref, x_ref, wlin_ref, blin_ref, o_ref):
    """One (batch, token-tile) grid point.

    ss_ref:   (1, 2, D)   f32   row 0 = shift, row 1 = 1 + scale
    x_ref:    (1, tT, D)  input dtype
    wlin_ref: (D, P)      MXU dtype (bf16 native path; f32 also supported)
    blin_ref: (1, P)      bias dtype (added in f32)
    o_ref:    (1, tT, P)
    """
    # ---- LayerNorm (biased variance, eps=1e-6, no affine) fused with adaLN ----
    x = x_ref[0].astype(jnp.float32)                      # (tT, D)
    mean = jnp.mean(x, axis=-1, keepdims=True)
    xc = x - mean
    var = jnp.mean(xc * xc, axis=-1, keepdims=True)
    inv = jax.lax.rsqrt(var + 1e-6)
    ss = ss_ref[0]                                        # (2, D) f32
    # Single fused expression (no separately bound xn) to minimize (tT, D) f32
    # temporaries Mosaic has to keep live.
    y = xc * inv * ss[1:2, :] + ss[0:1, :]                # (tT, D) f32

    # ---- Final projection on the MXU: weight-dtype operands, f32 accumulate ---
    w = wlin_ref[...]
    out = jnp.dot(y.astype(w.dtype), w, preferred_element_type=jnp.float32)
    out = out + blin_ref[...].astype(jnp.float32)
    o_ref[0] = out.astype(o_ref.dtype)


def official_final_layer(x, emb, w_mod, b_mod, w_lin, b_lin, *, mxu_dtype=jnp.bfloat16):
    """x: [B, T, D], emb: [B, D], w_mod: [D, 2D], b_mod: [2D],
    w_lin: [D, P], b_lin: [P]  ->  [B, T, P].

    mxu_dtype: dtype fed to the MXU for the projection (bf16 = native path on
    v5e/v6e/v7x).  Pass None to keep the weights' own dtype (full-f32 path).
    """
    B, T, D = x.shape
    P = w_lin.shape[1]

    # ---- adaLN modulation, hoisted out of the kernel (tiny M=B matmul) --------
    silu = emb * jax.nn.sigmoid(emb)
    mod = (silu @ w_mod + b_mod).astype(jnp.float32)      # (B, 2D)
    shift, scale = mod[:, :D], mod[:, D:]                 # chunk order = PyTorch (shift, scale)
    ss = jnp.stack([shift, 1.0 + scale], axis=1)          # (B, 2, D) f32

    # ---- weight prep: bf16 MXU operands, f32 LN / accumulation ----------------
    if mxu_dtype is not None and w_lin.dtype.itemsize > jnp.dtype(mxu_dtype).itemsize:
        w_lin = w_lin.astype(mxu_dtype)
    b_lin2 = b_lin.reshape(1, P)                          # bias stays in its own dtype

    # ---- token tiling: no padding of x / out, ragged last tile is masked ------
    budget, vmem_limit = _vmem_budget_bytes()
    tT = _choose_block_t(B, T, D, P,
                         x.dtype.itemsize, w_lin.dtype.itemsize,
                         b_lin2.dtype.itemsize, budget)
    grid = (B, pl.cdiv(T, tT))

    out = pl.pallas_call(
        _final_layer_kernel,
        out_shape=jax.ShapeDtypeStruct((B, T, P), x.dtype),
        grid_spec=pltpu.PrefetchScalarGridSpec(
            num_scalar_prefetch=0,
            grid=grid,
            in_specs=[
                # shift / (1+scale): per-batch, constant across token tiles.
                pl.BlockSpec((1, 2, D), lambda b, t: (b, 0, 0)),
                # x: pipelined over token tiles (double-buffered by BlockSpec).
                pl.BlockSpec((1, tT, D), lambda b, t: (b, t, 0)),
                # Projection weight / bias: constant index map, fetched once,
                # single-buffered to save VMEM.
                _single_buffered_spec((D, P), lambda b, t: (0, 0)),
                _single_buffered_spec((1, P), lambda b, t: (0, 0)),
            ],
            out_specs=pl.BlockSpec((1, tT, P), lambda b, t: (b, t, 0)),
        ),
        compiler_params=pltpu.CompilerParams(
            # No reduction axis in the grid; both axes independent, so both v7x
            # TensorCores get work.
            dimension_semantics=("parallel", "parallel"),
            vmem_limit_bytes=vmem_limit,
        ),
    )(ss, x, w_lin, b_lin2)

    return out


def reference(x, emb, w_mod, b_mod, w_lin, b_lin):
    D = x.shape[-1]
    silu = emb * jax.nn.sigmoid(emb)
    mod = silu @ w_mod + b_mod
    shift, scale = mod[:, :D], mod[:, D:]
    mean = x.mean(-1, keepdims=True)
    var = ((x - mean) ** 2).mean(-1, keepdims=True)
    xn = (x - mean) / jnp.sqrt(var + 1e-6)
    y = xn * (1.0 + scale[:, None, :]) + shift[:, None, :]
    return y @ w_lin + b_lin


if __name__ == "__main__":
    # Module hyperparameters (small, consistent with the forward pass)
    hidden_size = 32
    spatial_patch_size = 2
    temporal_patch_size = 1
    out_channels = 16
    P = spatial_patch_size * spatial_patch_size * temporal_patch_size * out_channels  # 64

    # T = 12 is NOT a multiple of the 8-row token tile, so this also exercises
    # the no-padding / masked ragged-last-tile path.
    B, T, D = 2, 12, hidden_size

    key = jax.random.PRNGKey(0)
    kx, ke, k1, k2, k3, k4 = jax.random.split(key, 6)

    x = jax.random.normal(kx, (B, T, D), jnp.float32)
    emb = jax.random.normal(ke, (B, D), jnp.float32)

    # Deterministic parameter init (synthetic; Linear stored as [in, out]).
    w_mod = jax.random.normal(k1, (D, 2 * D), jnp.float32) * 0.05
    b_mod = jax.random.normal(k2, (2 * D,), jnp.float32) * 0.05
    w_lin = jax.random.normal(k3, (D, P), jnp.float32) * 0.05
    b_lin = jax.random.normal(k4, (P,), jnp.float32) * 0.05

    ref = reference(x, emb, w_mod, b_mod, w_lin, b_lin)

    # Production path: bf16 weights on the MXU, f32 LN math / accumulation.
    out = jax.jit(official_final_layer)(x, emb, w_mod, b_mod, w_lin, b_lin)
    out = jax.block_until_ready(out)
    assert out.shape == (B, T, P)
    assert jnp.allclose(out, ref, atol=2e-2, rtol=2e-2), "bf16-path mismatch vs reference"

    # Full-f32 path: tight-tolerance check of the fused LN -> modulate -> linear math.
    out_f32 = jax.jit(lambda *a: official_final_layer(*a, mxu_dtype=None))(
        x, emb, w_mod, b_mod, w_lin, b_lin)
    out_f32 = jax.block_until_ready(out_f32)
    assert jnp.allclose(out_f32, ref, atol=1e-4, rtol=1e-4), "f32-path mismatch vs reference"

    print("KERNEL_OK")
</pallas_src>

<mosaic_0001>
module attributes {stable_mosaic.version = 11 : i64} {
  func.func @_final_layer_kernel(%arg0: i32, %arg1: i32, %arg2: memref<1x2x32xf32, #tpu.memory_space<vmem>>, %arg3: memref<1x8x32xf32, #tpu.memory_space<vmem>>, %arg4: memref<32x64xbf16, #tpu.memory_space<vmem>>, %arg5: memref<1x64xf32, #tpu.memory_space<vmem>>, %arg6: memref<1x8x64xf32, #tpu.memory_space<vmem>>) attributes {dimension_semantics = [#tpu.dimension_semantics<parallel>, #tpu.dimension_semantics<parallel>], iteration_bounds = array<i64: 2, 2>, scalar_prefetch = 0 : i64, scratch_operands = 0 : i64, tpu.core_type = #tpu.core_type<tc>, window_params = [{transform_indices = @transform_0, window_bounds = array<i64: 1, 2, 32>}, {transform_indices = @transform_1, window_bounds = array<i64: 1, 8, 32>}, {pipeline_mode = #tpu.pipeline_mode<synchronous>, transform_indices = @transform_2, window_bounds = array<i64: 32, 64>}, {pipeline_mode = #tpu.pipeline_mode<synchronous>, transform_indices = @transform_3, window_bounds = array<i64: 1, 64>}, {transform_indices = @transform_4, window_bounds = array<i64: 1, 8, 64>}]} {
    %c0 = arith.constant 0 : index
    %c0_0 = arith.constant 0 : index
    %c0_1 = arith.constant 0 : index
    %0 = vector.load %arg3[%c0, %c0_0, %c0_1] : memref<1x8x32xf32, #tpu.memory_space<vmem>>, vector<1x8x32xf32>
    %1 = vector.shape_cast %0 : vector<1x8x32xf32> to vector<8x32xf32>
    %cst = arith.constant dense<0.000000e+00> : vector<8xf32>
    %2 = vector.multi_reduction <add>, %1, %cst [1] : vector<8x32xf32> to vector<8xf32>
    %3 = vector.shape_cast %2 : vector<8xf32> to vector<8x1xf32>
    %cst_2 = arith.constant 3.200000e+01 : f32
    %4 = vector.broadcast %cst_2 : f32 to vector<8x1xf32>
    %5 = arith.divf %3, %4 : vector<8x1xf32>
    %6 = vector.broadcast %5 : vector<8x1xf32> to vector<8x32xf32>
    %7 = arith.subf %1, %6 : vector<8x32xf32>
    %8 = arith.mulf %7, %7 : vector<8x32xf32>
    %cst_3 = arith.constant dense<0.000000e+00> : vector<8xf32>
    %9 = vector.multi_reduction <add>, %8, %cst_3 [1] : vector<8x32xf32> to vector<8xf32>
    %10 = vector.shape_cast %9 : vector<8xf32> to vector<8x1xf32>
    %cst_4 = arith.constant 3.200000e+01 : f32
    %11 = vector.broadcast %cst_4 : f32 to vector<8x1xf32>
    %12 = arith.divf %10, %11 : vector<8x1xf32>
    %cst_5 = arith.constant 9.99999997E-7 : f32
    %13 = vector.broadcast %cst_5 : f32 to vector<8x1xf32>
    %14 = arith.addf %12, %13 : vector<8x1xf32>
    %15 = math.rsqrt %14 : vector<8x1xf32>
    %c0_6 = arith.constant 0 : index
    %c0_7 = arith.constant 0 : index
    %c0_8 = arith.constant 0 : index
    %16 = vector.load %arg2[%c0_6, %c0_7, %c0_8] : memref<1x2x32xf32, #tpu.memory_space<vmem>>, vector<1x2x32xf32>
    %17 = vector.shape_cast %16 : vector<1x2x32xf32> to vector<2x32xf32>
    %18 = vector.broadcast %15 : vector<8x1xf32> to vector<8x32xf32>
    %19 = arith.mulf %7, %18 : vector<8x32xf32>
    %20 = vector.extract_strided_slice %17 {offsets = [1, 0], sizes = [1, 32], strides = [1, 1]} : vector<2x32xf32> to vector<1x32xf32>
    %21 = vector.broadcast %20 : vector<1x32xf32> to vector<8x32xf32>
    %22 = arith.mulf %19, %21 : vector<8x32xf32>
    %23 = vector.extract_strided_slice %17 {offsets = [0, 0], sizes = [1, 32], strides = [1, 1]} : vector<2x32xf32> to vector<1x32xf32>
    %24 = vector.broadcast %23 : vector<1x32xf32> to vector<8x32xf32>
    %25 = arith.addf %22, %24 : vector<8x32xf32>
    %c0_9 = arith.constant 0 : index
    %c0_10 = arith.constant 0 : index
    %26 = vector.load %arg4[%c0_9, %c0_10] : memref<32x64xbf16, #tpu.memory_space<vmem>>, vector<32x64xbf16>
    %27 = arith.truncf %25 : vector<8x32xf32> to vector<8x32xbf16>
    %cst_11 = arith.constant dense<0.000000e+00> : vector<8x64xf32>
    %28 = tpu.matmul %27, %26, %cst_11 {dimension_numbers = #tpu.dot_dimension_numbers<[1], [0], [0], [1], [0, 0, 1, 1], [], []>} : vector<8x32xbf16>, vector<32x64xbf16>, vector<8x64xf32> -> vector<8x64xf32>
    %c0_12 = arith.constant 0 : index
    %c0_13 = arith.constant 0 : index
    %29 = vector.load %arg5[%c0_12, %c0_13] : memref<1x64xf32, #tpu.memory_space<vmem>>, vector<1x64xf32>
    %30 = vector.broadcast %29 : vector<1x64xf32> to vector<8x64xf32>
    %31 = arith.addf %28, %30 : vector<8x64xf32>
    %c0_14 = arith.constant 0 : index
    %c0_15 = arith.constant 0 : index
    %c0_16 = arith.constant 0 : index
    %32 = vector.load %arg6[%c0_14, %c0_15, %c0_16] : memref<1x8x64xf32, #tpu.memory_space<vmem>>, vector<1x8x64xf32>
    %33 = vector.shape_cast %32 : vector<1x8x64xf32> to vector<8x64xf32>
    %34 = vector.shape_cast %31 : vector<8x64xf32> to vector<1x8x64xf32>
    tpu.vector_store %arg6[%c0_14, %c0_15, %c0_16], %34 {strides = array<i32>} : memref<1x8x64xf32, #tpu.memory_space<vmem>>, vector<1x8x64xf32>,
    return
  }
  func.func @transform_0(%arg0: i32, %arg1: i32) -> (i32, i32, i32) {
    %c0_i32 = arith.constant 0 : i32
    %c0_i32_0 = arith.constant 0 : i32
    %c0_i32_1 = arith.constant 0 : i32
    return %arg0, %c0_i32, %c0_i32_0 : i32, i32, i32
  }
  func.func @transform_1(%arg0: i32, %arg1: i32) -> (i32, i32, i32) {
    %c0_i32 = arith.constant 0 : i32
    %c0_i32_0 = arith.constant 0 : i32
    return %arg0, %arg1, %c0_i32 : i32, i32, i32
  }
  func.func @transform_2(%arg0: i32, %arg1: i32) -> (i32, i32) {
    %c0_i32 = arith.constant 0 : i32
    %c0_i32_0 = arith.constant 0 : i32
    %c0_i32_1 = arith.constant 0 : i32
    return %c0_i32, %c0_i32_0 : i32, i32
  }
  func.func @transform_3(%arg0: i32, %arg1: i32) -> (i32, i32) {
    %c0_i32 = arith.constant 0 : i32
    %c0_i32_0 = arith.constant 0 : i32
    %c0_i32_1 = arith.constant 0 : i32
    return %c0_i32, %c0_i32_0 : i32, i32
  }
  func.func @transform_4(%arg0: i32, %arg1: i32) -> (i32, i32, i32) {
    %c0_i32 = arith.constant 0 : i32
    %c0_i32_0 = arith.constant 0 : i32
    return %arg0, %arg1, %c0_i32 : i32, i32, i32
  }
}

</mosaic_0001>

<llo_original>
// kernel: official_final_layer.1
$region0: #{official_final_layer.1}
  #allocation0 [shape = 'u32[]', space=smem, size = 0x4, offset = 0x4, fixed_abs, tag = 'smem constant byte address 0x4 - core index']
  #allocation1 [shape = 'u32[144,128]{1,0:T(1,128)}', space=vmem, size = 0x12000, scoped, tag = 'internal scratch']
  %s0 = inlined_call_operand.vmem [shape: f32[2,2,32], index: 0, kind: input, shape index: {}]
  %s1 = inlined_call_operand.vmem [shape: f32[2,12,32], index: 1, kind: input, shape index: {}]
  %s2 = inlined_call_operand.vmem [shape: bf16[32,64], index: 2, kind: input, shape index: {}]
  %s3 = inlined_call_operand.vmem [shape: f32[1,64], index: 3, kind: input, shape index: {}]
  %s4 = inlined_call_operand.vmem [shape: f32[2,12,64], index: 4, kind: output, shape index: {}]
  %s5 = sld [smem:[#allocation0]]
  $region49: #{official_final_layer.1} parent=0
    _
  %s7 = ssub.s32 1, %s5
  %s8 = scalar_select 0, %s7, %s5
  loop: start=0, step=1, limit=6
  $region2: #{official_final_layer.1} parent=0 // loop_pre_header
    _
  $region3: #{official_final_layer.1} parent=0 // loop_header
    %s10 = sphi 0, %s14
    %p11 = scmp.ge.s32.totalorder %s10, 6
    %s17 = sphi 0, %s29
    %s18 = sphi 0, %s25
    %s19 = sphi 0, %s17
    %s20 = sphi 0, %s18
    %s21 = sphi 0, %s19
    %s22 = sphi 0, %s20
    %s32 = sphi 0, %s34
    %s35 = sphi 0, %s32
    %s36 = sphi 0, %s35
    %s52 = sphi 0, %s36
    %s60 = sphi 0, %s62
    %s63 = sphi 0, %s60
    %s64 = sphi 0, %s63
    %s80 = sphi 0, %s64
    %s84 = sphi 0, %s84
    %s86 = sphi 0, %s84
    %s87 = sphi 0, %s86
    %s101 = sphi 0, %s87
    %s105 = sphi 0, %s105
    %s107 = sphi 0, %s105
    %s108 = sphi 0, %s107
    %s122 = sphi 0, %s108
    %s130 = sphi 0, %s132
    %s133 = sphi 0, %s130
    %s134 = sphi 0, %s133
    %s150 = sphi 0, %s134
  $region4: #{official_final_layer.1} parent=0 // loop_header_branch
    %13 = sbr.rel (%p11) target = $region8
  $region5: #{official_final_layer.1} parent=0 // loop_body
    %s15 = ssub.s32 %s10, 1
    %s16 = ssub.s32 %s10, 2
    %s23 = sadd.s32 1, %s18
    %p24 = scmp.ge.s32.totalorder %s23, 2
    %s25 = scalar_select %p24, 0, %s23
    %s26 = sadd.s32 1, %s17
    %s27 = scalar_select %p24, %s26, %s17
    %p28 = scmp.ge.s32.totalorder %s27, 2
    %s29 = scalar_select %p28, 0, %s27
    %s30 = ssub.s32 %s17, %s29
    %p31 = scmp.eq.s32.totalorder %s30, 0
    %s33 = sadd.s32 %s32, 1
    %s34 = scalar_select %p31, %s32, %s33
    %p37 = pneg %p31
    %p38 = scmp.eq.s32.totalorder %s10, 3
    %p39 = por %p37, %p38
    %p40 = scmp.ne.s32.totalorder %s32, %s35
    %p41 = scmp.eq.s32.totalorder %s10, 0
    %p42 = por %p40, %p41
    %p43 = scmp.ne.s32.totalorder %s32, %s35
    %p44 = scmp.eq.s32.totalorder %s15, 3
    %p45 = por %p43, %p44
    %p46 = scmp.ne.s32.totalorder %s35, %s36
    %p47 = scmp.eq.s32.totalorder %s15, 0
    %p48 = por %p46, %p47
    %p49 = scmp.ne.s32.totalorder %s35, %s36
    %p50 = scmp.eq.s32.totalorder %s16, 3
    %p51 = por %p49, %p50
    %p53 = scmp.ne.s32.totalorder %s36, %s52
    %p54 = scmp.eq.s32.totalorder %s16, 0
    %p55 = por %p53, %p54
    %s56 = ssub.s32 %s17, %s29
    %s57 = ssub.s32 %s18, %s25
    %s58 = sor.u32 %s56, %s57
    %p59 = scmp.eq.s32.totalorder %s58, 0
    %s61 = sadd.s32 %s60, 1
    %s62 = scalar_select %p59, %s60, %s61
    %p65 = pneg %p59
    %p66 = scmp.eq.s32.totalorder %s10, 3
    %p67 = por %p65, %p66
    %p68 = scmp.ne.s32.totalorder %s60, %s63
    %p69 = scmp.eq.s32.totalorder %s10, 0
    %p70 = por %p68, %p69
    %p71 = scmp.ne.s32.totalorder %s60, %s63
    %p72 = scmp.eq.s32.totalorder %s15, 3
    %p73 = por %p71, %p72
    %p74 = scmp.ne.s32.totalorder %s63, %s64
    %p75 = scmp.eq.s32.totalorder %s15, 0
    %p76 = por %p74, %p75
    %p77 = scmp.ne.s32.totalorder %s63, %s64
    %p78 = scmp.eq.s32.totalorder %s16, 3
    %p79 = por %p77, %p78
    %p81 = scmp.ne.s32.totalorder %s64, %s80
    %p82 = scmp.eq.s32.totalorder %s16, 0
    %p83 = por %p81, %p82
    %s85 = sadd.s32 %s84, 1
    %p88 = scmp.eq.s32.totalorder %s10, 3
    %p89 = scmp.ne.s32.totalorder %s84, %s86
    %p90 = scmp.eq.s32.totalorder %s10, 0
    %p91 = por %p89, %p90
    %p92 = scmp.ne.s32.totalorder %s84, %s86
    %p93 = scmp.eq.s32.totalorder %s15, 3
    %p94 = por %p92, %p93
    %p95 = scmp.ne.s32.totalorder %s86, %s87
    %p96 = scmp.eq.s32.totalorder %s15, 0
    %p97 = por %p95, %p96
    %p98 = scmp.ne.s32.totalorder %s86, %s87
    %p99 = scmp.eq.s32.totalorder %s16, 3
    %p100 = por %p98, %p99
    %p102 = scmp.ne.s32.totalorder %s87, %s101
    %p103 = scmp.eq.s32.totalorder %s16, 0
    %p104 = por %p102, %p103
    %s106 = sadd.s32 %s105, 1
    %p109 = scmp.eq.s32.totalorder %s10, 3
    %p110 = scmp.ne.s32.totalorder %s105, %s107
    %p111 = scmp.eq.s32.totalorder %s10, 0
    %p112 = por %p110, %p111
    %p113 = scmp.ne.s32.totalorder %s105, %s107
    %p114 = scmp.eq.s32.totalorder %s15, 3
    %p115 = por %p113, %p114
    %p116 = scmp.ne.s32.totalorder %s107, %s108
    %p117 = scmp.eq.s32.totalorder %s15, 0
    %p118 = por %p116, %p117
    %p119 = scmp.ne.s32.totalorder %s107, %s108
    %p120 = scmp.eq.s32.totalorder %s16, 3
    %p121 = por %p119, %p120
    %p123 = scmp.ne.s32.totalorder %s108, %s122
    %p124 = scmp.eq.s32.totalorder %s16, 0
    %p125 = por %p123, %p124
    %s126 = ssub.s32 %s17, %s29
    %s127 = ssub.s32 %s18, %s25
    %s128 = sor.u32 %s126, %s127
    %p129 = scmp.eq.s32.totalorder %s128, 0
    %s131 = sadd.s32 %s130, 1
    %s132 = scalar_select %p129, %s130, %s131
    %p135 = pneg %p129
    %p136 = scmp.eq.s32.totalorder %s10, 3
    %p137 = por %p135, %p136
    %p138 = scmp.ne.s32.totalorder %s130, %s133
    %p139 = scmp.eq.s32.totalorder %s10, 0
    %p140 = por %p138, %p139
    %p141 = scmp.ne.s32.totalorder %s130, %s133
    %p142 = scmp.eq.s32.totalorder %s15, 3
    %p143 = por %p141, %p142
    %p144 = scmp.ne.s32.totalorder %s133, %s134
    %p145 = scmp.eq.s32.totalorder %s15, 0
    %p146 = por %p144, %p145
    %p147 = scmp.ne.s32.totalorder %s133, %s134
    %p148 = scmp.eq.s32.totalorder %s16, 3
    %p149 = por %p147, %p148
    %p151 = scmp.ne.s32.totalorder %s134, %s150
    %p152 = scmp.eq.s32.totalorder %s16, 0
    %p153 = por %p151, %p152
    %p154 = scmp.le.s32.totalorder 1, %s10
    %p155 = scmp.lt.s32.totalorder %s10, 5
    %p156 = pnand %p154, %p155
    %p157 = pneg %p156
    // Predicated region
    $region9: #{official_final_layer.1} parent=5 // pred_check
      _
    $region10: #{official_final_layer.1} parent=5 // pred_check_branch
      %159 = sbr.rel (%p156) target = $region12
    $region11: #{official_final_layer.1} parent=5 // pred_region
      %s160 = ssub.s32 %s10, 1
      // Predicated region
      $region13: #{official_final_layer.1} parent=11 // pred_check
        %p161 = pneg %p97
      $region14: #{official_final_layer.1} parent=11 // pred_check_branch
        %163 = sbr.rel (%p161) target = $region16
      $region15: #{official_final_layer.1} parent=11 // pred_region
        _
      $region16: #{official_final_layer.1} parent=11 // pred_fallthru
        _
      // Predicated region
      $region17: #{official_final_layer.1} parent=11 // pred_check
        %p164 = pneg %p118
      $region18: #{official_final_layer.1} parent=11 // pred_check_branch
        %166 = sbr.rel (%p164) target = $region20
      $region19: #{official_final_layer.1} parent=11 // pred_region
        _
      $region20: #{official_final_layer.1} parent=11 // pred_fallthru
        _
    $region12: #{official_final_layer.1} parent=5 // pred_fallthru
      _
    %p167 = scmp.lt.s32.totalorder %s10, 4
    // Predicated region
    $region21: #{official_final_layer.1} parent=5 // pred_check
      %p168 = pneg %p167
    $region22: #{official_final_layer.1} parent=5 // pred_check_branch
      %170 = sbr.rel (%p168) target = $region24
    $region23: #{official_final_layer.1} parent=5 // pred_region
      // Predicated region
      $region25: #{official_final_layer.1} parent=23 // pred_check
        %p171 = pneg %p42
      $region26: #{official_final_layer.1} parent=23 // pred_check_branch
        %173 = sbr.rel (%p171) target = $region28
      $region27: #{official_final_layer.1} parent=23 // pred_region
        %p174 = scmp.lt.s32.totalorder %s17, 1
        %s175 = scalar_select %p174, %s17, 1
        %s176 = smul.addr %s175, 2
        %s177 = scalar_lea.vmem %s0, %s176
      $region28: #{official_final_layer.1} parent=23 // pred_fallthru
        _
      // Predicated region
      $region29: #{official_final_layer.1} parent=23 // pred_check
        %p178 = pneg %p70
      $region30: #{official_final_layer.1} parent=23 // pred_check_branch
        %180 = sbr.rel (%p178) target = $region32
      $region31: #{official_final_layer.1} parent=23 // pred_region
        %p181 = scmp.lt.s32.totalorder %s17, 1
        %s182 = scalar_select %p181, %s17, 1
        %p183 = scmp.lt.s32.totalorder %s18, 1
        %s184 = scalar_select %p183, %s18, 1
        %s185 = smul.addr %s182, 2
        %s186 = sadd.s32 %s184, %s185
        %s187 = smul.addr %s186, 8
        %s188 = scalar_lea.vmem %s1, %s187
      $region32: #{official_final_layer.1} parent=23 // pred_fallthru
        _
    $region24: #{official_final_layer.1} parent=5 // pred_fallthru
      _
    %p189 = scmp.le.s32.totalorder 1, %s10
    %p190 = scmp.lt.s32.totalorder %s10, 5
    %p191 = pnand %p189, %p190
    %p192 = pneg %p191
    // Predicated region
    $region33: #{official_final_layer.1} parent=5 // pred_check
      _
    $region34: #{official_final_layer.1} parent=5 // pred_check_branch
      %194 = sbr.rel (%p191) target = $region36
    $region35: #{official_final_layer.1} parent=5 // pred_region
      %s195 = ssub.s32 %s10, 1
      %p196 = scmp.lt.s32.totalorder %s19, 1
      %s197 = scalar_select %p196, %s19, 1
      %s198 = smul.addr %s197, 2
      %s199 = scalar_lea.vmem %s0, %s198
      %p200 = pneg %p48
      %p201 = pneg %p45
      %p202 = scmp.lt.s32.totalorder %s19, 1
      %s203 = scalar_select %p202, %s19, 1
      %p204 = scmp.lt.s32.totalorder %s20, 1
      %s205 = scalar_select %p204, %s20, 1
      %s206 = smul.addr %s203, 2
      %s207 = sadd.s32 %s205, %s206
      %s208 = smul.addr %s207, 8
      %s209 = scalar_lea.vmem %s1, %s208
      %p210 = pneg %p76
      %p211 = pneg %p73
      %p212 = pneg %p97
      %p213 = pneg %p94
      %p214 = pneg %p118
      %p215 = pneg %p115
      %p216 = pneg %p146
      %p217 = pneg %p143
      %p218 = scmp.lt.s32.totalorder %s19, 1
      %s219 = scalar_select %p218, %s19, 1
      %p220 = scmp.lt.s32.totalorder %s20, 1
      %s221 = scalar_select %p220, %s20, 1
      %s222 = smul.addr %s219, 2
      %s223 = sadd.s32 %s221, %s222
      %s224 = smul.addr %s223, 8
      %s225 = scalar_lea.vmem %s4, %s224
      %p226 = scmp.lt.s32.totalorder %s19, 1
      %s227 = scalar_select %p226, %s19, 1
      %s228 = smul.addr %s227, 2
      %s229 = scalar_lea.vmem %s0, %s228
      %p230 = scmp.lt.s32.totalorder %s19, 1
      %s231 = scalar_select %p230, %s19, 1
      %p232 = scmp.lt.s32.totalorder %s20, 1
      %s233 = scalar_select %p232, %s20, 1
      %s234 = smul.addr %s231, 2
      %s235 = sadd.s32 %s233, %s234
      %s236 = smul.addr %s235, 8
      %s237 = scalar_lea.vmem %s1, %s236
      %p238 = scmp.lt.s32.totalorder %s19, 1
      %s239 = scalar_select %p238, %s19, 1
      %p240 = scmp.lt.s32.totalorder %s20, 1
      %s241 = scalar_select %p240, %s20, 1
      %s242 = smul.addr %s239, 2
      %s243 = sadd.s32 %s241, %s242
      %s244 = smul.addr %s243, 8
      %s245 = scalar_lea.vmem %s4, %s244
      %v247 = vld [vmem:[%s237] sm:$0xff]
      %vm248 = vcmask 261120
      %v249 = vsel %vm248, %v247, 0.0
      %250 = vadd.xlane.f32.xlu0 %v249
      %v251 = vpop.xlane.xlu0 %250
      %v252 = vrcp.pop 32.0
      %v253 = vmul.f32 %v251, %v252
      %v254 = vsub.f32 %v247, %v253
      %v255 = vmul.f32 %v254, %v254
      %v256 = vsel %vm248, %v255, 0.0
      %257 = vadd.xlane.f32.xlu0 %v256
      %v258 = vpop.xlane.xlu0 %257
      %v259 = vmul.f32 %v258, %v252
      %v260 = vadd.f32 %v259, 1e-06
      %v261 = vrsqrt.pop %v260
      %v262 = vld [vmem:[%s229] sm:$0x3]
      %v263 = vmul.f32 %v254, %v261
      %v264 = vlaneseq
      %v265 = vshrl.u32 %v264, 7
      %v266 = vsub.s32 1, %v265
      %v267 = vrot.slane %v262, %v266
      %v268 = vmul.f32 %v263, %v267
      %v269 = vlaneseq
      %v270 = vshrl.u32 %v269, 7
      %v271 = vsub.s32 0, %v270
      %v272 = vrot.slane %v262, %v271
      %v273 = vadd.f32 %v268, %v272
      %v274 = vld [vmem:[%s2] sm:$0xf]
      %v275 = vld [vmem:[%s2 + $0x4] sm:$0xf]
      %v276 = vld [vmem:[%s2 + $0x8] sm:$0xf]
      %v277 = vld [vmem:[%s2 + $0xc] sm:$0xf]
      %v278 = vpack.c.bf16 %v273, %v273
      %v279 = vld [vmem:[%s3] sm:$0x1]
      %v281 = vlaneseq
      %v282 = vshrl.u32 %v281, 7
      %v283 = vsub.s32 0, %v282
      %v284 = vrot.slane %v279, %v283
      %v290 = vunpack.c.l.b16 %v274
      %v291 = vunpack.c.l.b16 %v275
      %v292 = vunpack.c.l.b16 %v276
      %v293 = vunpack.c.l.b16 %v277
      %v294 = vpack.c.b16 %v291, %v290
      %v295 = vpack.c.b16 %v293, %v292
      %v299 = vsel %vm248, %v278, 0
      %301 = vmatprep.subr.bf16.mxu0 0
      %302 = vmatpush1.bf16.msra.mxu0 %v294
      %303 = vmatprep.subr.bf16.mxu0 0
      %304 = vmatpush1.bf16.msra.mxu0 %v295
      %305 = vmatprep.subr.bf16.mxu0 0
      %306 = vmatpush1.bf16.msra.mxu0 0
      %307 = vmatprep.subr.bf16.mxu0 0
      %308 = vmatpush1.bf16.msra.mxu0 0
      %309 = vmatprep.subr.bf16.mxu0 0
      %310 = vmatpush1.bf16.msra.mxu0 0
      %311 = vmatprep.subr.bf16.mxu0 0
      %312 = vmatpush1.bf16.msra.mxu0 0
      %313 = vmatprep.subr.bf16.mxu0 0
      %314 = vmatpush1.bf16.msra.mxu0 0
      %315 = vmatprep.subr.bf16.mxu0 0
      %316 = vmatpush1.bf16.msra.mxu0 0
      %317 = vmatprep.subr.bf16.mxu0 0
      %318 = vmatpush1.bf16.msra.mxu0 0
      %319 = vmatprep.subr.bf16.mxu0 0
      %320 = vmatpush1.bf16.msra.mxu0 0
      %321 = vmatprep.subr.bf16.mxu0 0
      %322 = vmatpush1.bf16.msra.mxu0 0
      %323 = vmatprep.subr.bf16.mxu0 0
      %324 = vmatpush1.bf16.msra.mxu0 0
      %325 = vmatprep.subr.bf16.mxu0 0
      %326 = vmatpush1.bf16.msra.mxu0 0
      %327 = vmatprep.subr.bf16.mxu0 0
      %328 = vmatpush1.bf16.msra.mxu0 0
      %329 = vmatprep.subr.bf16.mxu0 0
      %330 = vmatpush1.bf16.msra.mxu0 0
      %331 = vmatprep.subr.bf16.mxu0 0
      %332 = vmatpush1.bf16.msra.mxu0 0
      %333 = vmatprep.mubr.bf16.mxu0 0
      %334 = vmatmul.mubr.bf16.gmra.mrb[0].mxu0 %v299
      %v335 = vpop.f32.mrb[0].mxu0
      %v336 = vadd.f32 %v284, %v335
      %v337 = vpop.f32.mrb[0].mxu0
      %v338 = vpop.f32.mrb[0].mxu0
      %v339 = vpop.f32.mrb[0].mxu0
      %340 = vdwg.mxu0
      %vm341 = vcmask 523264
      %342 = vst.msk [vmem:[%s245] sm:$0xff] %vm341, %v336
      %p343 = scmp.lt.s32.totalorder %s19, 1
      %s344 = scalar_select %p343, %s19, 1
      %p345 = scmp.lt.s32.totalorder %s20, 1
      %s346 = scalar_select %p345, %s20, 1
      %s347 = smul.addr %s344, 2
      %s348 = sadd.s32 %s346, %s347
      %s349 = smul.addr %s348, 8
      %s350 = scalar_lea.vmem %s4, %s349
      // Predicated region
      $region37: #{official_final_layer.1} parent=35 // pred_check
        %p351 = pneg %p143
      $region38: #{official_final_layer.1} parent=35 // pred_check_branch
        %353 = sbr.rel (%p351) target = $region40
      $region39: #{official_final_layer.1} parent=35 // pred_region
        _
      $region40: #{official_final_layer.1} parent=35 // pred_fallthru
        _
    $region36: #{official_final_layer.1} parent=5 // pred_fallthru
      _
    %p354 = scmp.le.s32.totalorder 2, %s10
    // Predicated region
    $region41: #{official_final_layer.1} parent=5 // pred_check
      %p355 = pneg %p354
    $region42: #{official_final_layer.1} parent=5 // pred_check_branch
      %357 = sbr.rel (%p355) target = $region44
    $region43: #{official_final_layer.1} parent=5 // pred_region
      %s358 = ssub.s32 %s10, 2
      // Predicated region
      $region45: #{official_final_layer.1} parent=43 // pred_check
        %p359 = pneg %p149
      $region46: #{official_final_layer.1} parent=43 // pred_check_branch
        %361 = sbr.rel (%p359) target = $region48
      $region47: #{official_final_layer.1} parent=43 // pred_region
        %p362 = scmp.lt.s32.totalorder %s21, 1
        %s363 = scalar_select %p362, %s21, 1
        %p364 = scmp.lt.s32.totalorder %s22, 1
        %s365 = scalar_select %p364, %s22, 1
        %s366 = smul.addr %s363, 2
        %s367 = sadd.s32 %s365, %s366
        %s368 = smul.addr %s367, 8
        %s369 = scalar_lea.vmem %s4, %s368
      $region48: #{official_final_layer.1} parent=43 // pred_fallthru
        _
    $region44: #{official_final_layer.1} parent=5 // pred_fallthru
      _
  $region6: #{official_final_layer.1} parent=0 // loop_footer
    %s14 = sadd.s32 1, %s10
  $region7: #{official_final_layer.1} parent=0 // loop_footer_branch
    %9 = sbr.rel target = $region3
  $region8: #{official_final_layer.1} parent=0 // loop_exit
    _

</llo_original>
